<compile_context>
chip_gen: v5e
topology: v5e:2x2
jax: 0.10.0
libtpu: 0.0.40
codegen_flags: <defaults>
</compile_context>

<pallas_src>
import jax
import jax.numpy as jnp
from jax.experimental import pallas as pl
from jax.experimental.pallas import tpu as pltpu

D_STATE = 32     # solver state dimension (last dim of x)
HIDDEN = 64      # solver hidden width
TM_MAX = 2048    # max row tile (multiple of 16); ~1 MiB/buffer in f32 -> fits VMEM easily


def _round_up(a, b):
    return ((a + b - 1) // b) * b


def _solver_mlp_kernel(x_ref, t_ref, w1x_ref, w1t_ref, b1_ref, w2_ref, b2_ref, o_ref):
    # pre-activation: [TM, D] @ [D, H] (MXU, f32 acc) + t * w1_t (VPU) + b1
    pre = jnp.dot(x_ref[...], w1x_ref[...], preferred_element_type=jnp.float32)
    pre = (
        pre
        + t_ref[...].astype(jnp.float32) * w1t_ref[...].astype(jnp.float32)
        + b1_ref[...].astype(jnp.float32)
    )
    h = jnp.tanh(pre)                                   # f32 tanh on EUP
    h = h.astype(w2_ref.dtype)                          # match MXU operand dtype
    out = (
        jnp.dot(h, w2_ref[...], preferred_element_type=jnp.float32)
        + b2_ref[...].astype(jnp.float32)
    )
    o_ref[...] = out.astype(o_ref.dtype)


def solver_mlp_pallas(x, t, w1x, w1t, b1, w2, b2, *, tm_max=TM_MAX):
    """x: [N, D], t: [N, 1]; returns [N, D_out]. No wrapper-side padding/concat."""
    n, d = x.shape
    hdim = w1x.shape[1]
    dout = w2.shape[1]

    # Row tile: as large as possible (amortize per-step overhead, fill MXU M),
    # multiple of 16 (bf16 sublane packing), capped at tm_max.
    tm = min(tm_max, _round_up(n, 16))
    grid = (pl.cdiv(n, tm),)

    return pl.pallas_call(
        _solver_mlp_kernel,
        out_shape=jax.ShapeDtypeStruct((n, dout), x.dtype),
        grid=grid,
        in_specs=[
            pl.BlockSpec((tm, d), lambda i: (i, 0)),        # x rows
            pl.BlockSpec((tm, 1), lambda i: (i, 0)),        # t rows
            pl.BlockSpec((d, hdim), lambda i: (0, 0)),      # W1_x  (VMEM-resident)
            pl.BlockSpec((1, hdim), lambda i: (0, 0)),      # w1_t
            pl.BlockSpec((1, hdim), lambda i: (0, 0)),      # b1
            pl.BlockSpec((hdim, dout), lambda i: (0, 0)),   # W2
            pl.BlockSpec((1, dout), lambda i: (0, 0)),      # b2
        ],
        out_specs=pl.BlockSpec((tm, dout), lambda i: (i, 0)),
        compiler_params=pltpu.CompilerParams(
            dimension_semantics=("parallel",),
        ),
    )(x, t, w1x, w1t, b1, w2, b2)


def solver_wrapper_forward(x, t, params, backwards=False, compute_dtype=None):
    """Exact port of SolverWrapper.forward semantics (t reshaping), then solver(x, t).

    compute_dtype: dtype used for the kernel I/O and MXU operands (e.g. bf16 on
    v6e/v7x); accumulation and tanh stay in f32 inside the kernel.
    """
    assert x.ndim - t.ndim == 1
    t = t[..., None]  # t.unsqueeze(-1)
    if t.shape[-3] != x.shape[-3]:
        # torch.repeat_interleave(x.shape[-3], dim=-3)
        t = jnp.repeat(t, x.shape[-3], axis=-3)
    if x.ndim == 4:
        # torch.repeat_interleave(x.shape[0], dim=0)
        t = jnp.repeat(t, x.shape[0], axis=0)

    # --- solver(x, t): ODE-func MLP on concat([x, t], -1), with the concat
    # folded into the kernel (W1 split into x-rows and the t-row). ---
    w1, b1, w2, b2 = params
    d = x.shape[-1]
    w1x, w1t = w1[:d], w1[d:]          # [D, H], [1, H]

    dt = compute_dtype if compute_dtype is not None else x.dtype
    x_flat = x.reshape(-1, d).astype(dt)
    t_flat = jnp.broadcast_to(t, x.shape[:-1] + (1,)).reshape(-1, 1).astype(dt)

    y = solver_mlp_pallas(
        x_flat, t_flat,
        w1x.astype(dt), w1t.astype(dt), b1.astype(dt),
        w2.astype(dt), b2.astype(dt),
    )
    return y.reshape(x.shape[:-1] + (y.shape[-1],))


def _reference_forward(x, t, params):
    """Pure-jnp reference (f32) for correctness check."""
    w1, b1, w2, b2 = params
    t = t[..., None]
    if t.shape[-3] != x.shape[-3]:
        t = jnp.repeat(t, x.shape[-3], axis=-3)
    if x.ndim == 4:
        t = jnp.repeat(t, x.shape[0], axis=0)
    t_full = jnp.broadcast_to(t, x.shape[:-1] + (1,))
    xt = jnp.concatenate([x, t_full], axis=-1)
    h = jnp.tanh(xt @ w1 + b1)
    return h @ w2 + b2


if __name__ == "__main__":
    key = jax.random.PRNGKey(0)
    kx, k1, k2, k3, k4 = jax.random.split(key, 5)

    # x: [n_traj, n_timepoints, D] ; t: [1, n_timepoints]  (ndim(x) - ndim(t) == 1,
    # exercises the repeat_interleave branch along dim -3)
    n_traj, n_tp = 4, 8
    x = jax.random.normal(kx, (n_traj, n_tp, D_STATE), dtype=jnp.float32)
    t = jnp.linspace(0.0, 1.0, n_tp, dtype=jnp.float32)[None, :]

    # Deterministic solver parameters.
    w1 = 0.1 * jax.random.normal(k1, (D_STATE + 1, HIDDEN), dtype=jnp.float32)
    b1 = 0.1 * jax.random.normal(k2, (1, HIDDEN), dtype=jnp.float32)
    w2 = 0.1 * jax.random.normal(k3, (HIDDEN, D_STATE), dtype=jnp.float32)
    b2 = 0.1 * jax.random.normal(k4, (1, D_STATE), dtype=jnp.float32)
    params = (w1, b1, w2, b2)

    y_ref = _reference_forward(x, t, params)

    # f32 path (tight tolerance; also the sensible v5e default).
    y_f32 = solver_wrapper_forward(x, t, params, compute_dtype=jnp.float32)
    y_f32 = jax.block_until_ready(y_f32)
    assert y_f32.shape == (n_traj, n_tp, D_STATE)
    assert jnp.allclose(y_f32, y_ref, atol=1e-5, rtol=1e-5)

    # bf16 I/O path (v6e/v7x bandwidth win; f32 accumulation + f32 tanh inside).
    y_bf16 = solver_wrapper_forward(x, t, params, compute_dtype=jnp.bfloat16)
    y_bf16 = jax.block_until_ready(y_bf16)
    assert y_bf16.shape == (n_traj, n_tp, D_STATE)
    assert jnp.allclose(y_bf16.astype(jnp.float32), y_ref, atol=5e-2, rtol=5e-2)

    print("KERNEL_OK")
</pallas_src>

<mosaic_0001>
module attributes {stable_mosaic.version = 11 : i64} {
  func.func @_solver_mlp_kernel(%arg0: i32, %arg1: memref<32x32xf32, #tpu.memory_space<vmem>>, %arg2: memref<32x1xf32, #tpu.memory_space<vmem>>, %arg3: memref<32x64xf32, #tpu.memory_space<vmem>>, %arg4: memref<1x64xf32, #tpu.memory_space<vmem>>, %arg5: memref<1x64xf32, #tpu.memory_space<vmem>>, %arg6: memref<64x32xf32, #tpu.memory_space<vmem>>, %arg7: memref<1x32xf32, #tpu.memory_space<vmem>>, %arg8: memref<32x32xf32, #tpu.memory_space<vmem>>) attributes {dimension_semantics = [#tpu.dimension_semantics<parallel>], iteration_bounds = array<i64: 1>, scalar_prefetch = 0 : i64, scratch_operands = 0 : i64, tpu.core_type = #tpu.core_type<tc>, window_params = [{transform_indices = @transform_0, window_bounds = array<i64: 32, 32>}, {transform_indices = @transform_1, window_bounds = array<i64: 32, 1>}, {pipeline_mode = #tpu.pipeline_mode<synchronous>, transform_indices = @transform_2, window_bounds = array<i64: 32, 64>}, {pipeline_mode = #tpu.pipeline_mode<synchronous>, transform_indices = @transform_3, window_bounds = array<i64: 1, 64>}, {pipeline_mode = #tpu.pipeline_mode<synchronous>, transform_indices = @transform_4, window_bounds = array<i64: 1, 64>}, {pipeline_mode = #tpu.pipeline_mode<synchronous>, transform_indices = @transform_5, window_bounds = array<i64: 64, 32>}, {pipeline_mode = #tpu.pipeline_mode<synchronous>, transform_indices = @transform_6, window_bounds = array<i64: 1, 32>}, {transform_indices = @transform_7, window_bounds = array<i64: 32, 32>}]} {
    %c0 = arith.constant 0 : index
    %c0_0 = arith.constant 0 : index
    %0 = vector.load %arg1[%c0, %c0_0] : memref<32x32xf32, #tpu.memory_space<vmem>>, vector<32x32xf32>
    %c0_1 = arith.constant 0 : index
    %c0_2 = arith.constant 0 : index
    %1 = vector.load %arg3[%c0_1, %c0_2] : memref<32x64xf32, #tpu.memory_space<vmem>>, vector<32x64xf32>
    %cst = arith.constant dense<0.000000e+00> : vector<32x64xf32>
    %2 = tpu.matmul %0, %1, %cst {dimension_numbers = #tpu.dot_dimension_numbers<[1], [0], [0], [1], [0, 0, 1, 1], [], []>} : vector<32x32xf32>, vector<32x64xf32>, vector<32x64xf32> -> vector<32x64xf32>
    %c0_3 = arith.constant 0 : index
    %c0_4 = arith.constant 0 : index
    %3 = vector.load %arg2[%c0_3, %c0_4] : memref<32x1xf32, #tpu.memory_space<vmem>>, vector<32x1xf32>
    %c0_5 = arith.constant 0 : index
    %c0_6 = arith.constant 0 : index
    %4 = vector.load %arg4[%c0_5, %c0_6] : memref<1x64xf32, #tpu.memory_space<vmem>>, vector<1x64xf32>
    %5 = vector.broadcast %3 : vector<32x1xf32> to vector<32x64xf32>
    %6 = vector.broadcast %4 : vector<1x64xf32> to vector<32x64xf32>
    %7 = arith.mulf %5, %6 : vector<32x64xf32>
    %8 = arith.addf %2, %7 : vector<32x64xf32>
    %c0_7 = arith.constant 0 : index
    %c0_8 = arith.constant 0 : index
    %9 = vector.load %arg5[%c0_7, %c0_8] : memref<1x64xf32, #tpu.memory_space<vmem>>, vector<1x64xf32>
    %10 = vector.broadcast %9 : vector<1x64xf32> to vector<32x64xf32>
    %11 = arith.addf %8, %10 : vector<32x64xf32>
    %12 = math.tanh %11 : vector<32x64xf32>
    %c0_9 = arith.constant 0 : index
    %c0_10 = arith.constant 0 : index
    %13 = vector.load %arg6[%c0_9, %c0_10] : memref<64x32xf32, #tpu.memory_space<vmem>>, vector<64x32xf32>
    %cst_11 = arith.constant dense<0.000000e+00> : vector<32x32xf32>
    %14 = tpu.matmul %12, %13, %cst_11 {dimension_numbers = #tpu.dot_dimension_numbers<[1], [0], [0], [1], [0, 0, 1, 1], [], []>} : vector<32x64xf32>, vector<64x32xf32>, vector<32x32xf32> -> vector<32x32xf32>
    %c0_12 = arith.constant 0 : index
    %c0_13 = arith.constant 0 : index
    %15 = vector.load %arg7[%c0_12, %c0_13] : memref<1x32xf32, #tpu.memory_space<vmem>>, vector<1x32xf32>
    %16 = vector.broadcast %15 : vector<1x32xf32> to vector<32x32xf32>
    %17 = arith.addf %14, %16 : vector<32x32xf32>
    %c0_14 = arith.constant 0 : index
    %c0_15 = arith.constant 0 : index
    %18 = vector.load %arg8[%c0_14, %c0_15] : memref<32x32xf32, #tpu.memory_space<vmem>>, vector<32x32xf32>
    tpu.vector_store %arg8[%c0_14, %c0_15], %17 {strides = array<i32>} : memref<32x32xf32, #tpu.memory_space<vmem>>, vector<32x32xf32>,
    return
  }
  func.func @transform_0(%arg0: i32) -> (i32, i32) {
    %c0_i32 = arith.constant 0 : i32
    %c0_i32_0 = arith.constant 0 : i32
    return %arg0, %c0_i32 : i32, i32
  }
  func.func @transform_1(%arg0: i32) -> (i32, i32) {
    %c0_i32 = arith.constant 0 : i32
    %c0_i32_0 = arith.constant 0 : i32
    return %arg0, %c0_i32 : i32, i32
  }
  func.func @transform_2(%arg0: i32) -> (i32, i32) {
    %c0_i32 = arith.constant 0 : i32
    %c0_i32_0 = arith.constant 0 : i32
    %c0_i32_1 = arith.constant 0 : i32
    return %c0_i32, %c0_i32_0 : i32, i32
  }
  func.func @transform_3(%arg0: i32) -> (i32, i32) {
    %c0_i32 = arith.constant 0 : i32
    %c0_i32_0 = arith.constant 0 : i32
    %c0_i32_1 = arith.constant 0 : i32
    return %c0_i32, %c0_i32_0 : i32, i32
  }
  func.func @transform_4(%arg0: i32) -> (i32, i32) {
    %c0_i32 = arith.constant 0 : i32
    %c0_i32_0 = arith.constant 0 : i32
    %c0_i32_1 = arith.constant 0 : i32
    return %c0_i32, %c0_i32_0 : i32, i32
  }
  func.func @transform_5(%arg0: i32) -> (i32, i32) {
    %c0_i32 = arith.constant 0 : i32
    %c0_i32_0 = arith.constant 0 : i32
    %c0_i32_1 = arith.constant 0 : i32
    return %c0_i32, %c0_i32_0 : i32, i32
  }
  func.func @transform_6(%arg0: i32) -> (i32, i32) {
    %c0_i32 = arith.constant 0 : i32
    %c0_i32_0 = arith.constant 0 : i32
    %c0_i32_1 = arith.constant 0 : i32
    return %c0_i32, %c0_i32_0 : i32, i32
  }
  func.func @transform_7(%arg0: i32) -> (i32, i32) {
    %c0_i32 = arith.constant 0 : i32
    %c0_i32_0 = arith.constant 0 : i32
    return %arg0, %c0_i32 : i32, i32
  }
}

</mosaic_0001>

<llo_original>
// kernel: tpu_custom_call.1
$region0: #{tpu_custom_call.1}
  #allocation0 [shape = 'u32[]', space=smem, size = 0x4, offset = 0x4, fixed_abs, tag = 'smem constant byte address 0x4 - core index']
  #allocation1 [shape = 'u32[72,128]{1,0:T(1,128)}', space=vmem, size = 0x9000, scoped, tag = 'internal scratch']
  %s0 = inlined_call_operand.vmem [shape: f32[32,32], index: 0, kind: input, shape index: {}]
  %s1 = inlined_call_operand.vmem [shape: f32[32,1], index: 1, kind: input, shape index: {}]
  %s2 = inlined_call_operand.vmem [shape: f32[32,64], index: 2, kind: input, shape index: {}]
  %s3 = inlined_call_operand.vmem [shape: f32[1,64], index: 3, kind: input, shape index: {}]
  %s4 = inlined_call_operand.vmem [shape: f32[1,64], index: 4, kind: input, shape index: {}]
  %s5 = inlined_call_operand.vmem [shape: f32[64,32], index: 5, kind: input, shape index: {}]
  %s6 = inlined_call_operand.vmem [shape: f32[1,32], index: 6, kind: input, shape index: {}]
  %s7 = inlined_call_operand.hbm [shape: f32[32,32], index: 7, kind: output, shape index: {}]
  %s8 = sld [smem:[#allocation0]]
  $region38: #{tpu_custom_call.1} parent=0
    _
  %s10 = ssub.s32 1, %s8
  %s11 = scalar_select 0, %s10, %s8
  $region1: #{tpu_custom_call.1} parent=0
    #allocation2 [shape = 'u8[16384]{0}', space=vmem, size = 0x4000, scoped, tag = 'output window, operand 0, single buffered']
    #allocation3 [shape = 's32[1]{0}', space=sflag, size = 0x4, scoped, tag = 'scoped memory for tpu_custom_call.1']
    %12 = vsyncpa [#allocation3], 0
    // Predicated region
    $region2: #{tpu_custom_call.1} parent=1 // pred_check
      _
    $region3: #{tpu_custom_call.1} parent=1 // pred_check_branch
      %14 = sbr.rel (0) target = $region5
    $region4: #{tpu_custom_call.1} parent=1 // pred_region
      _
    $region5: #{tpu_custom_call.1} parent=1 // pred_fallthru
      _
    // Predicated region
    $region6: #{tpu_custom_call.1} parent=1 // pred_check
      _
    $region7: #{tpu_custom_call.1} parent=1 // pred_check_branch
      %16 = sbr.rel (0) target = $region9
    $region8: #{tpu_custom_call.1} parent=1 // pred_region
      _
    $region9: #{tpu_custom_call.1} parent=1 // pred_fallthru
      _
    // Predicated region
    $region10: #{tpu_custom_call.1} parent=1 // pred_check
      _
    $region11: #{tpu_custom_call.1} parent=1 // pred_check_branch
      %18 = sbr.rel (0) target = $region13
    $region12: #{tpu_custom_call.1} parent=1 // pred_region
      _
    $region13: #{tpu_custom_call.1} parent=1 // pred_fallthru
      _
    // Predicated region
    $region14: #{tpu_custom_call.1} parent=1 // pred_check
      _
    $region15: #{tpu_custom_call.1} parent=1 // pred_check_branch
      %20 = sbr.rel (0) target = $region17
    $region16: #{tpu_custom_call.1} parent=1 // pred_region
      _
    $region17: #{tpu_custom_call.1} parent=1 // pred_fallthru
      _
    // Predicated region
    $region18: #{tpu_custom_call.1} parent=1 // pred_check
      _
    $region19: #{tpu_custom_call.1} parent=1 // pred_check_branch
      %22 = sbr.rel (0) target = $region21
    $region20: #{tpu_custom_call.1} parent=1 // pred_region
      _
    $region21: #{tpu_custom_call.1} parent=1 // pred_fallthru
      _
    // Predicated region
    $region22: #{tpu_custom_call.1} parent=1 // pred_check
      _
    $region23: #{tpu_custom_call.1} parent=1 // pred_check_branch
      %24 = sbr.rel (0) target = $region25
    $region24: #{tpu_custom_call.1} parent=1 // pred_region
      _
    $region25: #{tpu_custom_call.1} parent=1 // pred_fallthru
      _
    // Predicated region
    $region26: #{tpu_custom_call.1} parent=1 // pred_check
      _
    $region27: #{tpu_custom_call.1} parent=1 // pred_check_branch
      %26 = sbr.rel (0) target = $region29
    $region28: #{tpu_custom_call.1} parent=1 // pred_region
      _
    $region29: #{tpu_custom_call.1} parent=1 // pred_fallthru
      _
    %v27 = vld [vmem:[%s0] sm:$0xff]
    %v28 = vld [vmem:[%s0 + $0x8] sm:$0xff]
    %v29 = vld [vmem:[%s0 + $0x10] sm:$0xff]
    %v30 = vld [vmem:[%s0 + $0x18] sm:$0xff]
    %v31 = vld [vmem:[%s2] sm:$0xff]
    %v32 = vld [vmem:[%s2 + $0x8] sm:$0xff]
    %v33 = vld [vmem:[%s2 + $0x10] sm:$0xff]
    %v34 = vld [vmem:[%s2 + $0x18] sm:$0xff]
    %v35 = vld [vmem:[%s1] sm:$0xff]
    %v36 = vld [vmem:[%s1 + $0x8] sm:$0xff]
    %v37 = vld [vmem:[%s1 + $0x10] sm:$0xff]
    %v38 = vld [vmem:[%s1 + $0x18] sm:$0xff]
    %v39 = vld [vmem:[%s3] sm:$0x1]
    %41 = vset.pattern.permute.xlu0 0
    %42 = vperm.xlu0 %41, %v35
    %v43 = vpop.permute.xlu0 %42
    %46 = vset.pattern.permute.xlu0 0
    %47 = vperm.xlu0 %46, %v36
    %v48 = vpop.permute.xlu0 %47
    %51 = vset.pattern.permute.xlu0 0
    %52 = vperm.xlu0 %51, %v37
    %v53 = vpop.permute.xlu0 %52
    %56 = vset.pattern.permute.xlu0 0
    %57 = vperm.xlu0 %56, %v38
    %v58 = vpop.permute.xlu0 %57
    %v61 = vperm.slane %v39, 0
    %v63 = vmul.f32 %v43, %v61
    %v64 = vmul.f32 %v48, %v61
    %v65 = vmul.f32 %v53, %v61
    %v66 = vmul.f32 %v58, %v61
    %vm67 = vcmask 261120
    %v69 = vsel %vm67, %v27, 0
    %v72 = vsel %vm67, %v28, 0
    %v75 = vsel %vm67, %v29, 0
    %v78 = vsel %vm67, %v30, 0
    %80 = vmatpush.msra.mxu0 0.0
    %81 = vmatpush.msra.mxu0 0.0
    %82 = vmatpush.msra.mxu0 0.0
    %83 = vmatpush.msra.mxu0 0.0
    %84 = vmatpush.msra.mxu0 0.0
    %85 = vmatpush.msra.mxu0 0.0
    %86 = vmatpush.msra.mxu0 0.0
    %87 = vmatpush.msra.mxu0 0.0
    %88 = vmatpush.msra.mxu0 0.0
    %89 = vmatpush.msra.mxu0 0.0
    %90 = vmatpush.msra.mxu0 0.0
    %91 = vmatpush.msra.mxu0 0.0
    %92 = vmatpush.msra.mxu0 %v34
    %93 = vmatpush.msra.mxu0 %v33
    %94 = vmatpush.msra.mxu0 %v32
    %95 = vmatpush.msra.mxu0 %v31
    %96 = vmatmul.f32.gmra.mxu0 %v69
    %v97 = vpop.f32.mrf.mxu0
    %v98 = vadd.f32 %v63, %v97
    %99 = vmatmul.f32.gmra.mxu0 %v72
    %v100 = vpop.f32.mrf.mxu0
    %v101 = vadd.f32 %v64, %v100
    %102 = vmatmul.f32.gmra.mxu0 %v75
    %v103 = vpop.f32.mrf.mxu0
    %v104 = vadd.f32 %v65, %v103
    %105 = vmatmul.f32.gmra.mxu0 %v78
    %v106 = vpop.f32.mrf.mxu0
    %v107 = vadd.f32 %v66, %v106
    %108 = vdwg.mxu0
    %v109 = vld [vmem:[%s4] sm:$0x1]
    %v111 = vperm.slane %v109, 0
    %v113 = vadd.f32 %v98, %v111
    %v114 = vadd.f32 %v101, %v111
    %v115 = vadd.f32 %v104, %v111
    %v116 = vadd.f32 %v107, %v111
    %v117 = vtanh.pop %v113
    %v118 = vtanh.pop %v114
    %v119 = vtanh.pop %v115
    %v120 = vtanh.pop %v116
    %v121 = vld [vmem:[%s5] sm:$0xff]
    %v122 = vld [vmem:[%s5 + $0x8] sm:$0xff]
    %v123 = vld [vmem:[%s5 + $0x10] sm:$0xff]
    %v124 = vld [vmem:[%s5 + $0x18] sm:$0xff]
    %v125 = vld [vmem:[%s5 + $0x20] sm:$0xff]
    %v126 = vld [vmem:[%s5 + $0x28] sm:$0xff]
    %v127 = vld [vmem:[%s5 + $0x30] sm:$0xff]
    %v128 = vld [vmem:[%s5 + $0x38] sm:$0xff]
    %v129 = vld [vmem:[%s6] sm:$0x1]
    %v131 = vperm.slane %v129, 0
    %vm133 = vcmask 523264
    %v135 = vsel %vm133, %v117, 0
    %v138 = vsel %vm133, %v118, 0
    %v141 = vsel %vm133, %v119, 0
    %v144 = vsel %vm133, %v120, 0
    %146 = vmatpush.msra.mxu0 0.0
    %147 = vmatpush.msra.mxu0 0.0
    %148 = vmatpush.msra.mxu0 0.0
    %149 = vmatpush.msra.mxu0 0.0
    %150 = vmatpush.msra.mxu0 0.0
    %151 = vmatpush.msra.mxu0 0.0
    %152 = vmatpush.msra.mxu0 0.0
    %153 = vmatpush.msra.mxu0 0.0
    %154 = vmatpush.msra.mxu0 %v128
    %155 = vmatpush.msra.mxu0 %v127
    %156 = vmatpush.msra.mxu0 %v126
    %157 = vmatpush.msra.mxu0 %v125
    %158 = vmatpush.msra.mxu0 %v124
    %159 = vmatpush.msra.mxu0 %v123
    %160 = vmatpush.msra.mxu0 %v122
    %161 = vmatpush.msra.mxu0 %v121
    %162 = vmatmul.f32.gmra.mxu0 %v135
    %v163 = vpop.f32.mrf.mxu0
    %v164 = vadd.f32 %v131, %v163
    %165 = vmatmul.f32.gmra.mxu0 %v138
    %v166 = vpop.f32.mrf.mxu0
    %v167 = vadd.f32 %v131, %v166
    %168 = vmatmul.f32.gmra.mxu0 %v141
    %v169 = vpop.f32.mrf.mxu0
    %v170 = vadd.f32 %v131, %v169
    %171 = vmatmul.f32.gmra.mxu0 %v144
    %v172 = vpop.f32.mrf.mxu0
    %v173 = vadd.f32 %v131, %v172
    %174 = vdwg.mxu0
    %175 = vst.msk [vmem:[#allocation2] sm:$0xff] %vm67, %v164
    %176 = vst.msk [vmem:[#allocation2 + $0x8] sm:$0xff] %vm67, %v167
    %177 = vst.msk [vmem:[#allocation2 + $0x10] sm:$0xff] %vm67, %v170
    %178 = vst.msk [vmem:[#allocation2 + $0x18] sm:$0xff] %vm67, %v173
    // Predicated region
    $region30: #{tpu_custom_call.1} parent=1 // pred_check
      _
    $region31: #{tpu_custom_call.1} parent=1 // pred_check_branch
      %180 = sbr.rel (0) target = $region33
    $region32: #{tpu_custom_call.1} parent=1 // pred_region
      %182 = vsyncadd [#allocation3], 0
      %s183 = sshll.u32 [#allocation2], 4
      %s184 = int_to_ptr.vmem [resolvable:$true] %s183
      %s185 = sshll.u32 %s7, 4
      %s186 = int_to_ptr.hbm [resolvable:$true] %s185
      %191 = dma.vmem_to_hbm [thread:$0]  %s184, 512, %s186, [#allocation3], 128, 128, 8
    $region33: #{tpu_custom_call.1} parent=1 // pred_fallthru
      _
    // Predicated region
    $region34: #{tpu_custom_call.1} parent=1 // pred_check
      _
    $region35: #{tpu_custom_call.1} parent=1 // pred_check_branch
      %193 = sbr.rel (0) target = $region37
    $region36: #{tpu_custom_call.1} parent=1 // pred_region
      %195 = dma.done [#allocation3], 512
    $region37: #{tpu_custom_call.1} parent=1 // pred_fallthru
      _
    %196 = vsyncpa [#allocation3], 1

</llo_original>
